<compile_context>
chip_gen: v7x
topology: tpu7x:2x2x1
jax: 0.10.0
libtpu: 0.0.40
codegen_flags: <defaults>
</compile_context>

<pallas_src>
import jax
import jax.numpy as jnp
from jax.experimental import pallas as pl
from jax.experimental.pallas import tpu as pltpu


def learned_up_unit_kernel(x_ref, w_ref, o_ref):
    # x_ref: (1, 1, H, W)  VMEM
    # w_ref: (C, 16)       SMEM, pre-combined phase weights, flat index = a*8+b*4+u*2+v
    # o_ref: (1, 1, H, 4W) VMEM (row-phase a=0 columns then a=1 columns, per source row)
    _, _, H, W = x_ref.shape
    ci = pl.program_id(1)                                  # channel index

    x = x_ref[0, 0].astype(jnp.float32)                    # (H, W)

    # --- zero-pad the SMALL original x by 1 (conv padding=1, expressed on the x grid) ---
    zr = jnp.zeros((1, W), jnp.float32)
    xr = jnp.concatenate([zr, x, zr], axis=0)              # (H+2, W)
    zc = jnp.zeros((H + 2, 1), jnp.float32)
    xp = jnp.concatenate([zc, xr, zc], axis=1)             # (H+2, W+2)

    # 9 shifted views: s[r][cc][i, j] = x[i + r - 1, j + cc - 1] (zero outside)
    s = [[xp[r:r + H, cc:cc + W] for cc in range(3)] for r in range(3)]

    # --- 4-phase 2x2 depthwise conv (4 MACs / output pixel) ---
    # phase (a, b) uses taps s[a+u][b+v], u, v in {0,1}, with host-precombined weights.
    ph = [[None, None], [None, None]]
    for a in range(2):
        for b in range(2):
            acc = None
            for u in range(2):
                for v in range(2):
                    wsc = w_ref[ci, a * 8 + b * 4 + u * 2 + v]   # scalar from SMEM
                    term = s[a + u][b + v] * wsc
                    acc = term if acc is None else acc + term
            ph[a][b] = acc                                       # (H, W) f32

    # --- even/odd column interleave via constant 0/1 permutation matmuls (idle MXU) ---
    # row_a[i, 2j]   = ph[a][0][i, j]
    # row_a[i, 2j+1] = ph[a][1][i, j]
    j_in = jax.lax.broadcasted_iota(jnp.int32, (W, 2 * W), 0)
    q_out = jax.lax.broadcasted_iota(jnp.int32, (W, 2 * W), 1)
    pe = (q_out == 2 * j_in).astype(jnp.float32)            # (W, 2W) scatter j -> 2j
    po = (q_out == 2 * j_in + 1).astype(jnp.float32)        # (W, 2W) scatter j -> 2j+1

    rows = []
    for a in range(2):
        rows.append(jnp.dot(ph[a][0], pe, preferred_element_type=jnp.float32)
                    + jnp.dot(ph[a][1], po, preferred_element_type=jnp.float32))

    # Row interleave is free: output row i holds [row_0[i, :], row_1[i, :]] contiguously,
    # and the wrapper reshape (N, C, H, 4W) -> (N, C, 2H, 2W) is metadata-only.
    o_ref[0, 0] = jnp.concatenate(rows, axis=1).astype(o_ref.dtype)   # (H, 4W)


def _phase_weights(w_oihw):
    """(C,1,3,3) depthwise weights -> (C,16) f32 phase-combined weights."""
    C = w_oihw.shape[0]
    w3 = w_oihw[:, 0].astype(jnp.float32)                   # (C, 3, 3)
    # R[a, u, dy]: which original rows dy contribute to phase-a tap u (same for columns).
    R = jnp.array([[[1., 0., 0.], [0., 1., 1.]],
                   [[1., 1., 0.], [0., 0., 1.]]], dtype=jnp.float32)   # (2, 2, 3)
    pw = jnp.einsum('aur,crs,bvs->cabuv', R, w3, R)          # (C, 2, 2, 2, 2)
    return pw.reshape(C, 16)


def learned_up_unit(x_nchw, w_oihw):
    """x_nchw: (N, C, H, W); w_oihw: (C, 1, 3, 3) depthwise weights. Returns (N, C, 2H, 2W)."""
    N, C, H, W = x_nchw.shape
    pw = _phase_weights(w_oihw)                              # (C, 16) f32 -> SMEM

    out_flat = pl.pallas_call(
        learned_up_unit_kernel,
        out_shape=jax.ShapeDtypeStruct((N, C, H, 4 * W), x_nchw.dtype),
        grid_spec=pltpu.PrefetchScalarGridSpec(
            num_scalar_prefetch=0,
            grid=(N, C),
            in_specs=[
                pl.BlockSpec((1, 1, H, W), lambda n, c: (n, c, 0, 0)),
                pl.BlockSpec(memory_space=pltpu.MemorySpace.SMEM),
            ],
            out_specs=pl.BlockSpec((1, 1, H, 4 * W), lambda n, c: (n, c, 0, 0)),
        ),
        compiler_params=pltpu.CompilerParams(
            dimension_semantics=("parallel", "parallel")),
    )(x_nchw, pw)

    # Free (metadata-only) reshape: [n, c, i, a*2W + q] == [n, c, 2i + a, q].
    return out_flat.reshape(N, C, 2 * H, 2 * W)


if __name__ == "__main__":
    key = jax.random.PRNGKey(0)
    kx, kw = jax.random.split(key)
    N, C, H, W = 2, 4, 16, 16

    x = jax.random.normal(kx, (N, C, H, W), dtype=jnp.float32)
    # Deterministic depthwise weights (PyTorch default init: U(-1/sqrt(fan_in)), fan_in = 9)
    bound = 1.0 / 3.0
    w = jax.random.uniform(kw, (C, 1, 3, 3), minval=-bound, maxval=bound,
                           dtype=jnp.float32)

    out = jax.block_until_ready(learned_up_unit(x, w))

    # Pure-JAX reference of the PyTorch forward (NCHW): UpsamplingNearest2d(2) + grouped conv.
    up = jnp.repeat(jnp.repeat(x, 2, axis=2), 2, axis=3)
    ref = jax.lax.conv_general_dilated(
        up, w, window_strides=(1, 1), padding=((1, 1), (1, 1)),
        dimension_numbers=("NCHW", "OIHW", "NCHW"), feature_group_count=C)

    assert out.shape == (N, C, 2 * H, 2 * W)
    assert out.dtype == x.dtype
    assert jnp.allclose(out, ref, atol=1e-5, rtol=1e-5)
    print("KERNEL_OK")
</pallas_src>

<mosaic_0001>
module attributes {stable_mosaic.version = 11 : i64} {
  func.func @learned_up_unit_kernel(%arg0: i32, %arg1: i32, %arg2: memref<1x1x16x16xf32, #tpu.memory_space<vmem>>, %arg3: memref<4x16xf32, #tpu.memory_space<smem>>, %arg4: memref<1x1x16x64xf32, #tpu.memory_space<vmem>>) attributes {dimension_semantics = [#tpu.dimension_semantics<parallel>, #tpu.dimension_semantics<parallel>], iteration_bounds = array<i64: 2, 4>, scalar_prefetch = 0 : i64, scratch_operands = 0 : i64, tpu.core_type = #tpu.core_type<tc>, window_params = [{transform_indices = @transform_0, window_bounds = array<i64: 1, 1, 16, 16>}, {transform_indices = @transform_1, window_bounds = array<i64: 4, 16>}, {transform_indices = @transform_2, window_bounds = array<i64: 1, 1, 16, 64>}]} {
    %c0 = arith.constant 0 : index
    %c0_0 = arith.constant 0 : index
    %c0_1 = arith.constant 0 : index
    %c0_2 = arith.constant 0 : index
    %0 = vector.load %arg2[%c0, %c0_0, %c0_1, %c0_2] : memref<1x1x16x16xf32, #tpu.memory_space<vmem>>, vector<1x1x16x16xf32>
    %1 = vector.shape_cast %0 : vector<1x1x16x16xf32> to vector<16x16xf32>
    %cst = arith.constant 0.000000e+00 : f32
    %2 = vector.broadcast %cst : f32 to vector<1x16xf32>
    %3 = tpu.concatenate %2, %1, %2 in 0 : vector<1x16xf32>, vector<16x16xf32>, vector<1x16xf32> -> vector<18x16xf32>
    %cst_3 = arith.constant 0.000000e+00 : f32
    %4 = vector.broadcast %cst_3 : f32 to vector<18x1xf32>
    %5 = tpu.concatenate %4, %3, %4 in 1 : vector<18x1xf32>, vector<18x16xf32>, vector<18x1xf32> -> vector<18x18xf32>
    %6 = vector.extract_strided_slice %5 {offsets = [0, 0], sizes = [16, 16], strides = [1, 1]} : vector<18x18xf32> to vector<16x16xf32>
    %7 = vector.extract_strided_slice %5 {offsets = [0, 1], sizes = [16, 16], strides = [1, 1]} : vector<18x18xf32> to vector<16x16xf32>
    %8 = vector.extract_strided_slice %5 {offsets = [0, 2], sizes = [16, 16], strides = [1, 1]} : vector<18x18xf32> to vector<16x16xf32>
    %9 = vector.extract_strided_slice %5 {offsets = [1, 0], sizes = [16, 16], strides = [1, 1]} : vector<18x18xf32> to vector<16x16xf32>
    %10 = vector.extract_strided_slice %5 {offsets = [1, 1], sizes = [16, 16], strides = [1, 1]} : vector<18x18xf32> to vector<16x16xf32>
    %11 = vector.extract_strided_slice %5 {offsets = [1, 2], sizes = [16, 16], strides = [1, 1]} : vector<18x18xf32> to vector<16x16xf32>
    %12 = vector.extract_strided_slice %5 {offsets = [2, 0], sizes = [16, 16], strides = [1, 1]} : vector<18x18xf32> to vector<16x16xf32>
    %13 = vector.extract_strided_slice %5 {offsets = [2, 1], sizes = [16, 16], strides = [1, 1]} : vector<18x18xf32> to vector<16x16xf32>
    %14 = vector.extract_strided_slice %5 {offsets = [2, 2], sizes = [16, 16], strides = [1, 1]} : vector<18x18xf32> to vector<16x16xf32>
    %15 = arith.index_cast %arg1 : i32 to index
    %c0_4 = arith.constant 0 : index
    %16 = memref.load %arg3[%15, %c0_4] : memref<4x16xf32, #tpu.memory_space<smem>>
    %17 = vector.broadcast %16 : f32 to vector<16x16xf32>
    %18 = arith.mulf %6, %17 : vector<16x16xf32>
    %19 = arith.index_cast %arg1 : i32 to index
    %c1 = arith.constant 1 : index
    %20 = memref.load %arg3[%19, %c1] : memref<4x16xf32, #tpu.memory_space<smem>>
    %21 = vector.broadcast %20 : f32 to vector<16x16xf32>
    %22 = arith.mulf %7, %21 : vector<16x16xf32>
    %23 = arith.addf %18, %22 : vector<16x16xf32>
    %24 = arith.index_cast %arg1 : i32 to index
    %c2 = arith.constant 2 : index
    %25 = memref.load %arg3[%24, %c2] : memref<4x16xf32, #tpu.memory_space<smem>>
    %26 = vector.broadcast %25 : f32 to vector<16x16xf32>
    %27 = arith.mulf %9, %26 : vector<16x16xf32>
    %28 = arith.addf %23, %27 : vector<16x16xf32>
    %29 = arith.index_cast %arg1 : i32 to index
    %c3 = arith.constant 3 : index
    %30 = memref.load %arg3[%29, %c3] : memref<4x16xf32, #tpu.memory_space<smem>>
    %31 = vector.broadcast %30 : f32 to vector<16x16xf32>
    %32 = arith.mulf %10, %31 : vector<16x16xf32>
    %33 = arith.addf %28, %32 : vector<16x16xf32>
    %34 = arith.index_cast %arg1 : i32 to index
    %c4 = arith.constant 4 : index
    %35 = memref.load %arg3[%34, %c4] : memref<4x16xf32, #tpu.memory_space<smem>>
    %36 = vector.broadcast %35 : f32 to vector<16x16xf32>
    %37 = arith.mulf %7, %36 : vector<16x16xf32>
    %38 = arith.index_cast %arg1 : i32 to index
    %c5 = arith.constant 5 : index
    %39 = memref.load %arg3[%38, %c5] : memref<4x16xf32, #tpu.memory_space<smem>>
    %40 = vector.broadcast %39 : f32 to vector<16x16xf32>
    %41 = arith.mulf %8, %40 : vector<16x16xf32>
    %42 = arith.addf %37, %41 : vector<16x16xf32>
    %43 = arith.index_cast %arg1 : i32 to index
    %c6 = arith.constant 6 : index
    %44 = memref.load %arg3[%43, %c6] : memref<4x16xf32, #tpu.memory_space<smem>>
    %45 = vector.broadcast %44 : f32 to vector<16x16xf32>
    %46 = arith.mulf %10, %45 : vector<16x16xf32>
    %47 = arith.addf %42, %46 : vector<16x16xf32>
    %48 = arith.index_cast %arg1 : i32 to index
    %c7 = arith.constant 7 : index
    %49 = memref.load %arg3[%48, %c7] : memref<4x16xf32, #tpu.memory_space<smem>>
    %50 = vector.broadcast %49 : f32 to vector<16x16xf32>
    %51 = arith.mulf %11, %50 : vector<16x16xf32>
    %52 = arith.addf %47, %51 : vector<16x16xf32>
    %53 = arith.index_cast %arg1 : i32 to index
    %c8 = arith.constant 8 : index
    %54 = memref.load %arg3[%53, %c8] : memref<4x16xf32, #tpu.memory_space<smem>>
    %55 = vector.broadcast %54 : f32 to vector<16x16xf32>
    %56 = arith.mulf %9, %55 : vector<16x16xf32>
    %57 = arith.index_cast %arg1 : i32 to index
    %c9 = arith.constant 9 : index
    %58 = memref.load %arg3[%57, %c9] : memref<4x16xf32, #tpu.memory_space<smem>>
    %59 = vector.broadcast %58 : f32 to vector<16x16xf32>
    %60 = arith.mulf %10, %59 : vector<16x16xf32>
    %61 = arith.addf %56, %60 : vector<16x16xf32>
    %62 = arith.index_cast %arg1 : i32 to index
    %c10 = arith.constant 10 : index
    %63 = memref.load %arg3[%62, %c10] : memref<4x16xf32, #tpu.memory_space<smem>>
    %64 = vector.broadcast %63 : f32 to vector<16x16xf32>
    %65 = arith.mulf %12, %64 : vector<16x16xf32>
    %66 = arith.addf %61, %65 : vector<16x16xf32>
    %67 = arith.index_cast %arg1 : i32 to index
    %c11 = arith.constant 11 : index
    %68 = memref.load %arg3[%67, %c11] : memref<4x16xf32, #tpu.memory_space<smem>>
    %69 = vector.broadcast %68 : f32 to vector<16x16xf32>
    %70 = arith.mulf %13, %69 : vector<16x16xf32>
    %71 = arith.addf %66, %70 : vector<16x16xf32>
    %72 = arith.index_cast %arg1 : i32 to index
    %c12 = arith.constant 12 : index
    %73 = memref.load %arg3[%72, %c12] : memref<4x16xf32, #tpu.memory_space<smem>>
    %74 = vector.broadcast %73 : f32 to vector<16x16xf32>
    %75 = arith.mulf %10, %74 : vector<16x16xf32>
    %76 = arith.index_cast %arg1 : i32 to index
    %c13 = arith.constant 13 : index
    %77 = memref.load %arg3[%76, %c13] : memref<4x16xf32, #tpu.memory_space<smem>>
    %78 = vector.broadcast %77 : f32 to vector<16x16xf32>
    %79 = arith.mulf %11, %78 : vector<16x16xf32>
    %80 = arith.addf %75, %79 : vector<16x16xf32>
    %81 = arith.index_cast %arg1 : i32 to index
    %c14 = arith.constant 14 : index
    %82 = memref.load %arg3[%81, %c14] : memref<4x16xf32, #tpu.memory_space<smem>>
    %83 = vector.broadcast %82 : f32 to vector<16x16xf32>
    %84 = arith.mulf %13, %83 : vector<16x16xf32>
    %85 = arith.addf %80, %84 : vector<16x16xf32>
    %86 = arith.index_cast %arg1 : i32 to index
    %c15 = arith.constant 15 : index
    %87 = memref.load %arg3[%86, %c15] : memref<4x16xf32, #tpu.memory_space<smem>>
    %88 = vector.broadcast %87 : f32 to vector<16x16xf32>
    %89 = arith.mulf %14, %88 : vector<16x16xf32>
    %90 = arith.addf %85, %89 : vector<16x16xf32>
    %91 = tpu.iota {dimensions = array<i32: 0>} : vector<16x32xi32>
    %92 = tpu.iota {dimensions = array<i32: 1>} : vector<16x32xi32>
    %c2_i32 = arith.constant 2 : i32
    %93 = vector.broadcast %c2_i32 : i32 to vector<16x32xi32>
    %94 = arith.muli %93, %91 : vector<16x32xi32>
    %95 = arith.cmpi eq, %92, %94 : vector<16x32xi32>
    %96 = arith.extui %95 : vector<16x32xi1> to vector<16x32xi32>
    %97 = arith.sitofp %96 : vector<16x32xi32> to vector<16x32xf32>
    %c2_i32_5 = arith.constant 2 : i32
    %98 = vector.broadcast %c2_i32_5 : i32 to vector<16x32xi32>
    %99 = arith.muli %98, %91 : vector<16x32xi32>
    %c1_i32 = arith.constant 1 : i32
    %100 = vector.broadcast %c1_i32 : i32 to vector<16x32xi32>
    %101 = arith.addi %99, %100 : vector<16x32xi32>
    %102 = arith.cmpi eq, %92, %101 : vector<16x32xi32>
    %103 = arith.extui %102 : vector<16x32xi1> to vector<16x32xi32>
    %104 = arith.sitofp %103 : vector<16x32xi32> to vector<16x32xf32>
    %cst_6 = arith.constant dense<0.000000e+00> : vector<16x32xf32>
    %105 = tpu.matmul %33, %97, %cst_6 {dimension_numbers = #tpu.dot_dimension_numbers<[1], [0], [0], [1], [0, 0, 1, 1], [], []>} : vector<16x16xf32>, vector<16x32xf32>, vector<16x32xf32> -> vector<16x32xf32>
    %cst_7 = arith.constant dense<0.000000e+00> : vector<16x32xf32>
    %106 = tpu.matmul %52, %104, %cst_7 {dimension_numbers = #tpu.dot_dimension_numbers<[1], [0], [0], [1], [0, 0, 1, 1], [], []>} : vector<16x16xf32>, vector<16x32xf32>, vector<16x32xf32> -> vector<16x32xf32>
    %107 = arith.addf %105, %106 : vector<16x32xf32>
    %cst_8 = arith.constant dense<0.000000e+00> : vector<16x32xf32>
    %108 = tpu.matmul %71, %97, %cst_8 {dimension_numbers = #tpu.dot_dimension_numbers<[1], [0], [0], [1], [0, 0, 1, 1], [], []>} : vector<16x16xf32>, vector<16x32xf32>, vector<16x32xf32> -> vector<16x32xf32>
    %cst_9 = arith.constant dense<0.000000e+00> : vector<16x32xf32>
    %109 = tpu.matmul %90, %104, %cst_9 {dimension_numbers = #tpu.dot_dimension_numbers<[1], [0], [0], [1], [0, 0, 1, 1], [], []>} : vector<16x16xf32>, vector<16x32xf32>, vector<16x32xf32> -> vector<16x32xf32>
    %110 = arith.addf %108, %109 : vector<16x32xf32>
    %111 = tpu.concatenate %107, %110 in 1 : vector<16x32xf32>, vector<16x32xf32> -> vector<16x64xf32>
    %c0_10 = arith.constant 0 : index
    %c0_11 = arith.constant 0 : index
    %c0_12 = arith.constant 0 : index
    %c0_13 = arith.constant 0 : index
    %112 = vector.load %arg4[%c0_10, %c0_11, %c0_12, %c0_13] : memref<1x1x16x64xf32, #tpu.memory_space<vmem>>, vector<1x1x16x64xf32>
    %113 = vector.shape_cast %112 : vector<1x1x16x64xf32> to vector<16x64xf32>
    %114 = vector.shape_cast %111 : vector<16x64xf32> to vector<1x1x16x64xf32>
    tpu.vector_store %arg4[%c0_10, %c0_11, %c0_12, %c0_13], %114 {strides = array<i32>} : memref<1x1x16x64xf32, #tpu.memory_space<vmem>>, vector<1x1x16x64xf32>,
    return
  }
  func.func @transform_0(%arg0: i32, %arg1: i32) -> (i32, i32, i32, i32) {
    %c0_i32 = arith.constant 0 : i32
    %c0_i32_0 = arith.constant 0 : i32
    %c0_i32_1 = arith.constant 0 : i32
    return %arg0, %arg1, %c0_i32, %c0_i32_0 : i32, i32, i32, i32
  }
  func.func @transform_1(%arg0: i32, %arg1: i32) -> (i32, i32) {
    %c0_i32 = arith.constant 0 : i32
    %c0_i32_0 = arith.constant 0 : i32
    %c0_i32_1 = arith.constant 0 : i32
    return %c0_i32, %c0_i32_0 : i32, i32
  }
  func.func @transform_2(%arg0: i32, %arg1: i32) -> (i32, i32, i32, i32) {
    %c0_i32 = arith.constant 0 : i32
    %c0_i32_0 = arith.constant 0 : i32
    %c0_i32_1 = arith.constant 0 : i32
    return %arg0, %arg1, %c0_i32, %c0_i32_0 : i32, i32, i32, i32
  }
}

</mosaic_0001>

<llo_original>
// kernel: tpu_custom_call.1
$region0: #{tpu_custom_call.1}
  #allocation0 [shape = 'u32[]', space=smem, size = 0x4, offset = 0x4, fixed_abs, tag = 'smem constant byte address 0x4 - core index']
  #allocation1 [shape = 'u32[144,128]{1,0:T(1,128)}', space=vmem, size = 0x12000, scoped, tag = 'internal scratch']
  %s0 = inlined_call_operand.hbm [shape: f32[2,4,16,16], index: 0, kind: input, shape index: {}]
  %s1 = inlined_call_operand.hbm [shape: f32[4,16], index: 1, kind: input, shape index: {}]
  %s2 = inlined_call_operand.hbm [shape: f32[2,4,16,64], index: 2, kind: output, shape index: {}]
  %s3 = sld [smem:[#allocation0]]
  $region49: #{tpu_custom_call.1} parent=0
    _
  %s5 = ssub.s32 1, %s3
  %s6 = scalar_select 0, %s5, %s3
  $region1: #{tpu_custom_call.1} parent=0
    #allocation2 [shape = 'u8[16384]{0}', space=vmem, size = 0x4000, scoped, tag = 'input window, operand 0']
    #allocation3 [shape = 's32[2]{0}', space=sflag, size = 0x8, scoped, tag = 'scoped memory for tpu_custom_call.1']
    #allocation4 [shape = 's32[2]{0}', space=sflag, size = 0x8, scoped, tag = 'scoped memory for tpu_custom_call.1']
    #allocation5 [shape = 's32[2]{0}', space=sflag, size = 0x8, scoped, tag = 'scoped memory for tpu_custom_call.1']
    #allocation6 [shape = 'u8[2048]{0}', space=smem, size = 0x800, scoped, tag = 'input window, operand 1, single buffered']
    #allocation7 [shape = 'u8[16384]{0}', space=vmem, size = 0x4000, scoped, tag = 'output window, operand 0']
    %7 = vsyncpa [#allocation3], 0
    %s8 = scalar_lea.sflag [#allocation3], 1
    %9 = vsyncpa %s8, 0
    %10 = vsyncpa [#allocation5], 0
    %11 = vsyncpa [#allocation4], 0
    %s12 = scalar_lea.sflag [#allocation4], 1
    %13 = vsyncpa %s12, 0
    loop: start=0, step=1, limit=10
    $region2: #{tpu_custom_call.1} parent=1 // loop_pre_header
      _
    $region3: #{tpu_custom_call.1} parent=1 // loop_header
      %s15 = sphi 0, %s19
      %p16 = scmp.ge.s32.totalorder %s15, 10
      %s22 = sphi 0, %s34
      %s23 = sphi 0, %s30
      %s24 = sphi 0, %s22
      %s25 = sphi 0, %s23
      %s26 = sphi 0, %s24
      %s27 = sphi 0, %s25
      %s39 = sphi 0, %s41
      %s42 = sphi 0, %s39
      %s43 = sphi 0, %s42
      %s59 = sphi 0, %s43
      %s63 = sphi 0, %s63
      %s65 = sphi 0, %s63
      %s66 = sphi 0, %s65
      %s80 = sphi 0, %s66
      %s88 = sphi 0, %s90
      %s91 = sphi 0, %s88
      %s92 = sphi 0, %s91
      %s108 = sphi 0, %s92
    $region4: #{tpu_custom_call.1} parent=1 // loop_header_branch
      %18 = sbr.rel (%p16) target = $region8
    $region5: #{tpu_custom_call.1} parent=1 // loop_body
      %s20 = ssub.s32 %s15, 1
      %s21 = ssub.s32 %s15, 2
      %s28 = sadd.s32 1, %s23
      %p29 = scmp.ge.s32.totalorder %s28, 4
      %s30 = scalar_select %p29, 0, %s28
      %s31 = sadd.s32 1, %s22
      %s32 = scalar_select %p29, %s31, %s22
      %p33 = scmp.ge.s32.totalorder %s32, 2
      %s34 = scalar_select %p33, 0, %s32
      %s35 = ssub.s32 %s22, %s34
      %s36 = ssub.s32 %s23, %s30
      %s37 = sor.u32 %s35, %s36
      %p38 = scmp.eq.s32.totalorder %s37, 0
      %s40 = sadd.s32 %s39, 1
      %s41 = scalar_select %p38, %s39, %s40
      %p44 = pneg %p38
      %p45 = scmp.eq.s32.totalorder %s15, 7
      %p46 = por %p44, %p45
      %p47 = scmp.ne.s32.totalorder %s39, %s42
      %p48 = scmp.eq.s32.totalorder %s15, 0
      %p49 = por %p47, %p48
      %p50 = scmp.ne.s32.totalorder %s39, %s42
      %p51 = scmp.eq.s32.totalorder %s20, 7
      %p52 = por %p50, %p51
      %p53 = scmp.ne.s32.totalorder %s42, %s43
      %p54 = scmp.eq.s32.totalorder %s20, 0
      %p55 = por %p53, %p54
      %p56 = scmp.ne.s32.totalorder %s42, %s43
      %p57 = scmp.eq.s32.totalorder %s21, 7
      %p58 = por %p56, %p57
      %p60 = scmp.ne.s32.totalorder %s43, %s59
      %p61 = scmp.eq.s32.totalorder %s21, 0
      %p62 = por %p60, %p61
      %s64 = sadd.s32 %s63, 1
      %p67 = scmp.eq.s32.totalorder %s15, 7
      %p68 = scmp.ne.s32.totalorder %s63, %s65
      %p69 = scmp.eq.s32.totalorder %s15, 0
      %p70 = por %p68, %p69
      %p71 = scmp.ne.s32.totalorder %s63, %s65
      %p72 = scmp.eq.s32.totalorder %s20, 7
      %p73 = por %p71, %p72
      %p74 = scmp.ne.s32.totalorder %s65, %s66
      %p75 = scmp.eq.s32.totalorder %s20, 0
      %p76 = por %p74, %p75
      %p77 = scmp.ne.s32.totalorder %s65, %s66
      %p78 = scmp.eq.s32.totalorder %s21, 7
      %p79 = por %p77, %p78
      %p81 = scmp.ne.s32.totalorder %s66, %s80
      %p82 = scmp.eq.s32.totalorder %s21, 0
      %p83 = por %p81, %p82
      %s84 = ssub.s32 %s22, %s34
      %s85 = ssub.s32 %s23, %s30
      %s86 = sor.u32 %s84, %s85
      %p87 = scmp.eq.s32.totalorder %s86, 0
      %s89 = sadd.s32 %s88, 1
      %s90 = scalar_select %p87, %s88, %s89
      %p93 = pneg %p87
      %p94 = scmp.eq.s32.totalorder %s15, 7
      %p95 = por %p93, %p94
      %p96 = scmp.ne.s32.totalorder %s88, %s91
      %p97 = scmp.eq.s32.totalorder %s15, 0
      %p98 = por %p96, %p97
      %p99 = scmp.ne.s32.totalorder %s88, %s91
      %p100 = scmp.eq.s32.totalorder %s20, 7
      %p101 = por %p99, %p100
      %p102 = scmp.ne.s32.totalorder %s91, %s92
      %p103 = scmp.eq.s32.totalorder %s20, 0
      %p104 = por %p102, %p103
      %p105 = scmp.ne.s32.totalorder %s91, %s92
      %p106 = scmp.eq.s32.totalorder %s21, 7
      %p107 = por %p105, %p106
      %p109 = scmp.ne.s32.totalorder %s92, %s108
      %p110 = scmp.eq.s32.totalorder %s21, 0
      %p111 = por %p109, %p110
      %p112 = scmp.le.s32.totalorder 1, %s15
      %p113 = scmp.lt.s32.totalorder %s15, 9
      %p114 = pnand %p112, %p113
      %p115 = pneg %p114
      // Predicated region
      $region9: #{tpu_custom_call.1} parent=5 // pred_check
        _
      $region10: #{tpu_custom_call.1} parent=5 // pred_check_branch
        %117 = sbr.rel (%p114) target = $region12
      $region11: #{tpu_custom_call.1} parent=5 // pred_region
        %s118 = ssub.s32 %s15, 1
        // Predicated region
        $region13: #{tpu_custom_call.1} parent=11 // pred_check
          %p119 = pneg %p76
        $region14: #{tpu_custom_call.1} parent=11 // pred_check_branch
          %121 = sbr.rel (%p119) target = $region16
        $region15: #{tpu_custom_call.1} parent=11 // pred_region
          %s123 = ssub.s32 64, 64
          %124 = vsyncadd [#allocation5], %s123
          %127 = dma.hbm_to_smem %s1, 64, [#allocation6], [#allocation5]
        $region16: #{tpu_custom_call.1} parent=11 // pred_fallthru
          _
      $region12: #{tpu_custom_call.1} parent=5 // pred_fallthru
        _
      %p128 = scmp.lt.s32.totalorder %s15, 8
      // Predicated region
      $region17: #{tpu_custom_call.1} parent=5 // pred_check
        %p129 = pneg %p128
      $region18: #{tpu_custom_call.1} parent=5 // pred_check_branch
        %131 = sbr.rel (%p129) target = $region20
      $region19: #{tpu_custom_call.1} parent=5 // pred_region
        // Predicated region
        $region21: #{tpu_custom_call.1} parent=19 // pred_check
          %p132 = pneg %p49
        $region22: #{tpu_custom_call.1} parent=19 // pred_check_branch
          %134 = sbr.rel (%p132) target = $region24
        $region23: #{tpu_custom_call.1} parent=19 // pred_region
          %s135 = sand.u32 %s39, 1
          %s136 = scalar_lea.sflag [#allocation3], %s135
          %s137 = sand.u32 %s39, 1
          %s138 = smul.addr %s137, 16
          %s139 = scalar_lea.vmem [#allocation2], %s138
          %s141 = ssub.s32 256, 256
          %142 = vsyncadd %s136, %s141
          %s143 = smul.addr %s23, 2
          %s144 = smul.addr %s22, 8
          %s145 = sadd.s32 %s143, %s144
          %s146 = smul.addr %s145, 128
          %s147 = scalar_lea.hbm %s0, %s146
          %s148 = sshll.u32 %s139, 4
          %s149 = int_to_ptr.vmem [resolvable:$true] %s148
          %154 = dma.hbm_to_vmem [thread:$0]  %s147, 256, %s149, %s136, 128, 128, 8
        $region24: #{tpu_custom_call.1} parent=19 // pred_fallthru
          _
      $region20: #{tpu_custom_call.1} parent=5 // pred_fallthru
        _
      %p155 = scmp.le.s32.totalorder 1, %s15
      %p156 = scmp.lt.s32.totalorder %s15, 9
      %p157 = pnand %p155, %p156
      %p158 = pneg %p157
      // Predicated region
      $region25: #{tpu_custom_call.1} parent=5 // pred_check
        _
      $region26: #{tpu_custom_call.1} parent=5 // pred_check_branch
        %160 = sbr.rel (%p157) target = $region28
      $region27: #{tpu_custom_call.1} parent=5 // pred_region
        %s161 = ssub.s32 %s15, 1
        %s162 = sand.u32 %s42, 1
        %s163 = scalar_lea.sflag [#allocation3], %s162
        %s164 = sand.u32 %s42, 1
        %s165 = smul.addr %s164, 16
        %s166 = scalar_lea.vmem [#allocation2], %s165
        // Predicated region
        $region29: #{tpu_custom_call.1} parent=27 // pred_check
          %p167 = pneg %p55
        $region30: #{tpu_custom_call.1} parent=27 // pred_check_branch
          %169 = sbr.rel (%p167) target = $region32
        $region31: #{tpu_custom_call.1} parent=27 // pred_region
          %170 = dma.done %s163, 256
        $region32: #{tpu_custom_call.1} parent=27 // pred_fallthru
          _
        // Predicated region
        $region33: #{tpu_custom_call.1} parent=27 // pred_check
          %p171 = pneg %p76
        $region34: #{tpu_custom_call.1} parent=27 // pred_check_branch
          %173 = sbr.rel (%p171) target = $region36
        $region35: #{tpu_custom_call.1} parent=27 // pred_region
          %174 = dma.done [#allocation5], 64
        $region36: #{tpu_custom_call.1} parent=27 // pred_fallthru
          _
        %175 = sfence
        %s176 = sand.u32 %s42, 1
        %s177 = scalar_lea.sflag [#allocation3], %s176
        %s178 = sand.u32 %s42, 1
        %s179 = smul.addr %s178, 16
        %s180 = scalar_lea.vmem [#allocation2], %s179
        %p181 = pneg %p55
        %p182 = pneg %p52
        %p183 = pneg %p76
        %p184 = pneg %p73
        %p185 = pneg %p104
        %p186 = pneg %p101
        %s187 = sand.u32 %s91, 1
        %s188 = scalar_lea.sflag [#allocation4], %s187
        %s189 = sand.u32 %s91, 1
        %s190 = smul.addr %s189, 16
        %s191 = scalar_lea.vmem [#allocation7], %s190
        %v192 = vld [vmem:[%s166] sm:$0xff]
        %v193 = vld [vmem:[%s166 + $0x8] sm:$0xff]
        %vm196 = vcmask 1040384
        %v197 = vrot.slane %v192, 7
        %v198 = vrot.slane %v193, 7
        %v199 = vsel %vm196, %v197, %v198
        %v202 = vsel %vm196, 0.0, %v197
        %v203 = vsel %vm196, %v198, 0.0
        %206 = vrot.lane.b32.xlu0 %v202, 1
        %v207 = vpop.permute.xlu0 %206
        %208 = vrot.lane.b32.xlu0 %v199, 1
        %v209 = vpop.permute.xlu0 %208
        %210 = vrot.lane.b32.xlu0 %v203, 1
        %v211 = vpop.permute.xlu0 %210
        %vm215 = vcmask 7168
        %v216 = vsel %vm215, 0.0, %v207
        %v217 = vsel %vm215, 0.0, %v209
        %v218 = vsel %vm215, 0.0, %v211
        %vm219 = vcmask 138240
        %v220 = vsel %vm219, %v216, 0.0
        %v221 = vsel %vm219, %v217, 0.0
        %v222 = vsel %vm219, %v218, 0.0
        %s223 = smul.u32 %s25, 128
        %s224 = sld [smem:[#allocation6 + %s223]]
        %v225 = vstv %s224
        %v226 = vmul.f32 %v220, %v225
        %v227 = vmul.f32 %v221, %v225
        %s228 = sadd.s32 %s223, 1
        %s229 = sld [smem:[#allocation6 + %s228]]
        %v230 = vstv %s229
        %v231 = vmul.f32 %v220, %v230
        %v232 = vmul.f32 %v221, %v230
        %235 = vrot.lane.b32.xlu0 %v231, 127
        %v236 = vpop.permute.xlu0 %235
        %237 = vrot.lane.b32.xlu0 %v232, 127
        %v238 = vpop.permute.xlu0 %237
        %v241 = vadd.f32 %v226, %v236
        %v242 = vadd.f32 %v227, %v238
        %s243 = sadd.s32 %s223, 2
        %s244 = sld [smem:[#allocation6 + %s243]]
        %v245 = vstv %s244
        %v246 = vmul.f32 %v220, %v245
        %v247 = vmul.f32 %v221, %v245
        %v248 = vmul.f32 %v222, %v245
        %vm252 = vcmask 1046528
        %v253 = vrot.slane %v246, 1
        %v254 = vrot.slane %v247, 1
        %v255 = vsel %vm252, %v253, %v254
        %v256 = vrot.slane %v248, 1
        %v257 = vsel %vm252, %v254, %v256
        %v260 = vadd.f32 %v241, %v255
        %v261 = vadd.f32 %v242, %v257
        %s262 = sadd.s32 %s223, 3
        %s263 = sld [smem:[#allocation6 + %s262]]
        %v264 = vstv %s263
        %v265 = vmul.f32 %v220, %v264
        %v266 = vmul.f32 %v221, %v264
        %v267 = vmul.f32 %v222, %v264
        %v271 = vrot.slane %v265, 1
        %v272 = vrot.slane %v266, 1
        %v273 = vsel %vm252, %v271, %v272
        %v274 = vrot.slane %v267, 1
        %v275 = vsel %vm252, %v272, %v274
        %276 = vrot.lane.b32.xlu0 %v273, 127
        %v277 = vpop.permute.xlu0 %276
        %278 = vrot.lane.b32.xlu0 %v275, 127
        %v279 = vpop.permute.xlu0 %278
        %v282 = vadd.f32 %v260, %v277
        %v283 = vadd.f32 %v261, %v279
        %s284 = sadd.s32 %s223, 4
        %s285 = sld [smem:[#allocation6 + %s284]]
        %v286 = vstv %s285
        %v287 = vmul.f32 %v220, %v286
        %v288 = vmul.f32 %v221, %v286
        %s289 = sadd.s32 %s223, 5
        %s290 = sld [smem:[#allocation6 + %s289]]
        %v291 = vstv %s290
        %v292 = vmul.f32 %v220, %v291
        %v293 = vmul.f32 %v221, %v291
        %296 = vrot.lane.b32.xlu0 %v292, 127
        %v297 = vpop.permute.xlu0 %296
        %298 = vrot.lane.b32.xlu0 %v293, 127
        %v299 = vpop.permute.xlu0 %298
        %v302 = vadd.f32 %v287, %v297
        %v303 = vadd.f32 %v288, %v299
        %s304 = sadd.s32 %s223, 6
        %s305 = sld [smem:[#allocation6 + %s304]]
        %v306 = vstv %s305
        %v307 = vmul.f32 %v220, %v306
        %v308 = vmul.f32 %v221, %v306
        %v309 = vmul.f32 %v222, %v306
        %v313 = vrot.slane %v307, 1
        %v314 = vrot.slane %v308, 1
        %v315 = vsel %vm252, %v313, %v314
        %v316 = vrot.slane %v309, 1
        %v317 = vsel %vm252, %v314, %v316
        %v320 = vadd.f32 %v302, %v315
        %v321 = vadd.f32 %v303, %v317
        %s322 = sadd.s32 %s223, 7
        %s323 = sld [smem:[#allocation6 + %s322]]
        %v324 = vstv %s323
        %v325 = vmul.f32 %v220, %v324
        %v326 = vmul.f32 %v221, %v324
        %v327 = vmul.f32 %v222, %v324
        %v331 = vrot.slane %v325, 1
        %v332 = vrot.slane %v326, 1
        %v333 = vsel %vm252, %v331, %v332
        %v334 = vrot.slane %v327, 1
        %v335 = vsel %vm252, %v332, %v334
        %336 = vrot.lane.b32.xlu0 %v333, 127
        %v337 = vpop.permute.xlu0 %336
        %338 = vrot.lane.b32.xlu0 %v335, 127
        %v339 = vpop.permute.xlu0 %338
        %v342 = vadd.f32 %v320, %v337
        %v343 = vadd.f32 %v321, %v339
        %s344 = sadd.s32 %s223, 8
        %s345 = sld [smem:[#allocation6 + %s344]]
        %v346 = vstv %s345
        %v347 = vmul.f32 %v220, %v346
        %v348 = vmul.f32 %v221, %v346
        %v349 = vmul.f32 %v222, %v346
        %s350 = sadd.s32 %s223, 9
        %s351 = sld [smem:[#allocation6 + %s350]]
        %v352 = vstv %s351
        %v353 = vmul.f32 %v220, %v352
        %v354 = vmul.f32 %v221, %v352
        %v355 = vmul.f32 %v222, %v352
        %359 = vrot.lane.b32.xlu0 %v353, 127
        %v360 = vpop.permute.xlu0 %359
        %361 = vrot.lane.b32.xlu0 %v354, 127
        %v362 = vpop.permute.xlu0 %361
        %363 = vrot.lane.b32.xlu0 %v355, 127
        %v364 = vpop.permute.xlu0 %363
        %v368 = vadd.f32 %v347, %v360
        %v369 = vadd.f32 %v348, %v362
        %v370 = vadd.f32 %v349, %v364
        %s371 = sadd.s32 %s223, 10
        %s372 = sld [smem:[#allocation6 + %s371]]
        %v373 = vstv %s372
        %v374 = vmul.f32 %v220, %v373
        %v375 = vmul.f32 %v221, %v373
        %v376 = vmul.f32 %v222, %v373
        %v380 = vrot.slane %v374, 1
        %v381 = vrot.slane %v375, 1
        %v382 = vsel %vm252, %v380, %v381
        %v383 = vrot.slane %v376, 1
        %v384 = vsel %vm252, %v381, %v383
        %v388 = vadd.f32 %v368, %v382
        %v389 = vadd.f32 %v369, %v384
        %v390 = vadd.f32 %v370, %v383
        %s391 = sadd.s32 %s223, 11
        %s392 = sld [smem:[#allocation6 + %s391]]
        %v393 = vstv %s392
        %v394 = vmul.f32 %v220, %v393
        %v395 = vmul.f32 %v221, %v393
        %v396 = vmul.f32 %v222, %v393
        %v400 = vrot.slane %v394, 1
        %v401 = vrot.slane %v395, 1
        %v402 = vsel %vm252, %v400, %v401
        %v403 = vrot.slane %v396, 1
        %v404 = vsel %vm252, %v401, %v403
        %405 = vrot.lane.b32.xlu0 %v402, 127
        %v406 = vpop.permute.xlu0 %405
        %407 = vrot.lane.b32.xlu0 %v404, 127
        %v408 = vpop.permute.xlu0 %407
        %409 = vrot.lane.b32.xlu0 %v403, 127
        %v410 = vpop.permute.xlu0 %409
        %v414 = vadd.f32 %v388, %v406
        %v415 = vadd.f32 %v389, %v408
        %v416 = vadd.f32 %v390, %v410
        %s417 = sadd.s32 %s223, 12
        %s418 = sld [smem:[#allocation6 + %s417]]
        %v419 = vstv %s418
        %v420 = vmul.f32 %v220, %v419
        %v421 = vmul.f32 %v221, %v419
        %v422 = vmul.f32 %v222, %v419
        %s423 = sadd.s32 %s223, 13
        %s424 = sld [smem:[#allocation6 + %s423]]
        %v425 = vstv %s424
        %v426 = vmul.f32 %v220, %v425
        %v427 = vmul.f32 %v221, %v425
        %v428 = vmul.f32 %v222, %v425
        %432 = vrot.lane.b32.xlu0 %v426, 127
        %v433 = vpop.permute.xlu0 %432
        %434 = vrot.lane.b32.xlu0 %v427, 127
        %v435 = vpop.permute.xlu0 %434
        %436 = vrot.lane.b32.xlu0 %v428, 127
        %v437 = vpop.permute.xlu0 %436
        %v441 = vadd.f32 %v420, %v433
        %v442 = vadd.f32 %v421, %v435
        %v443 = vadd.f32 %v422, %v437
        %s444 = sadd.s32 %s223, 14
        %s445 = sld [smem:[#allocation6 + %s444]]
        %v446 = vstv %s445
        %v447 = vmul.f32 %v220, %v446
        %v448 = vmul.f32 %v221, %v446
        %v449 = vmul.f32 %v222, %v446
        %v453 = vrot.slane %v447, 1
        %v454 = vrot.slane %v448, 1
        %v455 = vsel %vm252, %v453, %v454
        %v456 = vrot.slane %v449, 1
        %v457 = vsel %vm252, %v454, %v456
        %v461 = vadd.f32 %v441, %v455
        %v462 = vadd.f32 %v442, %v457
        %v463 = vadd.f32 %v443, %v456
        %s464 = sadd.s32 %s223, 15
        %s465 = sld [smem:[#allocation6 + %s464]]
        %v466 = vstv %s465
        %v467 = vmul.f32 %v220, %v466
        %v468 = vmul.f32 %v221, %v466
        %v469 = vmul.f32 %v222, %v466
        %v473 = vrot.slane %v467, 1
        %v474 = vrot.slane %v468, 1
        %v475 = vsel %vm252, %v473, %v474
        %v476 = vrot.slane %v469, 1
        %v477 = vsel %vm252, %v474, %v476
        %478 = vrot.lane.b32.xlu0 %v475, 127
        %v479 = vpop.permute.xlu0 %478
        %480 = vrot.lane.b32.xlu0 %v477, 127
        %v481 = vpop.permute.xlu0 %480
        %482 = vrot.lane.b32.xlu0 %v476, 127
        %v483 = vpop.permute.xlu0 %482
        %v487 = vadd.f32 %v461, %v479
        %v488 = vadd.f32 %v462, %v481
        %v489 = vadd.f32 %v463, %v483
        %v490 = vlaneseq
        %v491 = vshrl.u32 %v490, 7
        %v492 = vadd.s32 %v491, 8
        %v493 = vlaneseq
        %v494 = vand.u32 %v493, 127
        %v495 = vmul.u32 %v491, 2
        %v496 = vmul.u32 %v492, 2
        %vm497 = vcmp.eq.s32.totalorder %v494, %v495
        %vm498 = vcmp.eq.s32.totalorder %v494, %v496
        %v499 = vsel %vm497, 1, 0
        %v500 = vsel %vm498, 1, 0
        %v501 = vcvt.s32.f32 %v499
        %v502 = vcvt.s32.f32 %v500
        %v503 = vadd.s32 %v495, 1
        %v504 = vadd.s32 %v496, 1
        %vm505 = vcmp.eq.s32.totalorder %v494, %v503
        %vm506 = vcmp.eq.s32.totalorder %v494, %v504
        %v507 = vsel %vm505, 1, 0
        %v508 = vsel %vm506, 1, 0
        %v509 = vcvt.s32.f32 %v507
        %v510 = vcvt.s32.f32 %v508
        %513 = vrot.lane.b32.xlu0 %v342, 127
        %v514 = vpop.permute.xlu0 %513
        %515 = vrot.lane.b32.xlu0 %v343, 127
        %v516 = vpop.permute.xlu0 %515
        %vm517 = vcmask 130048
        %v518 = vsel %vm517, %v514, 0
        %v520 = vsel %vm517, %v516, 0
        %522 = vmatprep.subr.mxu0 0.0
        %523 = vmatpush1.msra.mxu0 %v509
        %524 = vmatprep.subr.mxu0 0.0
        %525 = vmatpush1.msra.mxu0 %v510
        %526 = vmatprep.subr.mxu0 0.0
        %527 = vmatpush1.msra.mxu0 0.0
        %528 = vmatprep.subr.mxu0 0.0
        %529 = vmatpush1.msra.mxu0 0.0
        %530 = vmatprep.subr.mxu0 0.0
        %531 = vmatpush1.msra.mxu0 0.0
        %532 = vmatprep.subr.mxu0 0.0
        %533 = vmatpush1.msra.mxu0 0.0
        %534 = vmatprep.subr.mxu0 0.0
        %535 = vmatpush1.msra.mxu0 0.0
        %536 = vmatprep.subr.mxu0 0.0
        %537 = vmatpush1.msra.mxu0 0.0
        %538 = vmatprep.subr.mxu0 0.0
        %539 = vmatpush1.msra.mxu0 0.0
        %540 = vmatprep.subr.mxu0 0.0
        %541 = vmatpush1.msra.mxu0 0.0
        %542 = vmatprep.subr.mxu0 0.0
        %543 = vmatpush1.msra.mxu0 0.0
        %544 = vmatprep.subr.mxu0 0.0
        %545 = vmatpush1.msra.mxu0 0.0
        %546 = vmatprep.subr.mxu0 0.0
        %547 = vmatpush1.msra.mxu0 0.0
        %548 = vmatprep.subr.mxu0 0.0
        %549 = vmatpush1.msra.mxu0 0.0
        %550 = vmatprep.subr.mxu0 0.0
        %551 = vmatpush1.msra.mxu0 0.0
        %552 = vmatprep.subr.mxu0 0.0
        %553 = vmatpush1.msra.mxu0 0.0
        %554 = vmatprep.subr.mxu0 0.0
        %555 = vmatpush1.msra.mxu0 0.0
        %556 = vmatprep.subr.mxu0 0.0
        %557 = vmatpush1.msra.mxu0 0.0
        %558 = vmatprep.subr.mxu0 0.0
        %559 = vmatpush1.msra.mxu0 0.0
        %560 = vmatprep.subr.mxu0 0.0
        %561 = vmatpush1.msra.mxu0 0.0
        %562 = vmatprep.subr.mxu0 0.0
        %563 = vmatpush1.msra.mxu0 0.0
        %564 = vmatprep.subr.mxu0 0.0
        %565 = vmatpush1.msra.mxu0 0.0
        %566 = vmatprep.subr.mxu0 0.0
        %567 = vmatpush1.msra.mxu0 0.0
        %568 = vmatprep.subr.mxu0 0.0
        %569 = vmatpush1.msra.mxu0 0.0
        %570 = vmatprep.subr.mxu0 0.0
        %571 = vmatpush1.msra.mxu0 0.0
        %572 = vmatprep.subr.mxu0 0.0
        %573 = vmatpush1.msra.mxu0 0.0
        %574 = vmatprep.subr.mxu0 0.0
        %575 = vmatpush1.msra.mxu0 0.0
        %576 = vmatprep.subr.mxu0 0.0
        %577 = vmatpush1.msra.mxu0 0.0
        %578 = vmatprep.subr.mxu0 0.0
        %579 = vmatpush1.msra.mxu0 0.0
        %580 = vmatprep.subr.mxu0 0.0
        %581 = vmatpush1.msra.mxu0 0.0
        %582 = vmatprep.subr.mxu0 0.0
        %583 = vmatpush1.msra.mxu0 0.0
        %584 = vmatprep.subr.mxu0 0.0
        %585 = vmatpush1.msra.mxu0 0.0
        %586 = vmatprep.mubr.f32.mxu0 0.0
        %587 = vmatmul.mubr.f32.gmra.mrb[0].mxu0 %v518
        %v588 = vpop.f32.mrb[0].mxu0
        %v589 = vadd.f32 0.0, %v588
        %v590 = vpop.f32.mrb[0].mxu0
        %591 = vmatprep.mubr.f32.mxu0 0.0
        %592 = vmatmul.mubr.f32.gmra.mrb[0].mxu0 %v520
        %v593 = vpop.f32.mrb[0].mxu0
        %v594 = vadd.f32 0.0, %v593
        %v595 = vpop.f32.mrb[0].mxu0
        %596 = vdwg.mxu0
        %v598 = vsel %vm517, %v282, 0
        %v601 = vsel %vm517, %v283, 0
        %603 = vmatprep.subr.mxu0 0.0
        %604 = vmatpush1.msra.mxu0 %v501
        %605 = vmatprep.subr.mxu0 0.0
        %606 = vmatpush1.msra.mxu0 %v502
        %607 = vmatprep.subr.mxu0 0.0
        %608 = vmatpush1.msra.mxu0 0.0
        %609 = vmatprep.subr.mxu0 0.0
        %610 = vmatpush1.msra.mxu0 0.0
        %611 = vmatprep.subr.mxu0 0.0
        %612 = vmatpush1.msra.mxu0 0.0
        %613 = vmatprep.subr.mxu0 0.0
        %614 = vmatpush1.msra.mxu0 0.0
        %615 = vmatprep.subr.mxu0 0.0
        %616 = vmatpush1.msra.mxu0 0.0
        %617 = vmatprep.subr.mxu0 0.0
        %618 = vmatpush1.msra.mxu0 0.0
        %619 = vmatprep.subr.mxu0 0.0
        %620 = vmatpush1.msra.mxu0 0.0
        %621 = vmatprep.subr.mxu0 0.0
        %622 = vmatpush1.msra.mxu0 0.0
        %623 = vmatprep.subr.mxu0 0.0
        %624 = vmatpush1.msra.mxu0 0.0
        %625 = vmatprep.subr.mxu0 0.0
        %626 = vmatpush1.msra.mxu0 0.0
        %627 = vmatprep.subr.mxu0 0.0
        %628 = vmatpush1.msra.mxu0 0.0
        %629 = vmatprep.subr.mxu0 0.0
        %630 = vmatpush1.msra.mxu0 0.0
        %631 = vmatprep.subr.mxu0 0.0
        %632 = vmatpush1.msra.mxu0 0.0
        %633 = vmatprep.subr.mxu0 0.0
        %634 = vmatpush1.msra.mxu0 0.0
        %635 = vmatprep.subr.mxu0 0.0
        %636 = vmatpush1.msra.mxu0 0.0
        %637 = vmatprep.subr.mxu0 0.0
        %638 = vmatpush1.msra.mxu0 0.0
        %639 = vmatprep.subr.mxu0 0.0
        %640 = vmatpush1.msra.mxu0 0.0
        %641 = vmatprep.subr.mxu0 0.0
        %642 = vmatpush1.msra.mxu0 0.0
        %643 = vmatprep.subr.mxu0 0.0
        %644 = vmatpush1.msra.mxu0 0.0
        %645 = vmatprep.subr.mxu0 0.0
        %646 = vmatpush1.msra.mxu0 0.0
        %647 = vmatprep.subr.mxu0 0.0
        %648 = vmatpush1.msra.mxu0 0.0
        %649 = vmatprep.subr.mxu0 0.0
        %650 = vmatpush1.msra.mxu0 0.0
        %651 = vmatprep.subr.mxu0 0.0
        %652 = vmatpush1.msra.mxu0 0.0
        %653 = vmatprep.subr.mxu0 0.0
        %654 = vmatpush1.msra.mxu0 0.0
        %655 = vmatprep.subr.mxu0 0.0
        %656 = vmatpush1.msra.mxu0 0.0
        %657 = vmatprep.subr.mxu0 0.0
        %658 = vmatpush1.msra.mxu0 0.0
        %659 = vmatprep.subr.mxu0 0.0
        %660 = vmatpush1.msra.mxu0 0.0
        %661 = vmatprep.subr.mxu0 0.0
        %662 = vmatpush1.msra.mxu0 0.0
        %663 = vmatprep.subr.mxu0 0.0
        %664 = vmatpush1.msra.mxu0 0.0
        %665 = vmatprep.subr.mxu0 0.0
        %666 = vmatpush1.msra.mxu0 0.0
        %667 = vmatprep.mubr.f32.mxu0 0.0
        %668 = vmatmul.mubr.f32.gmra.mrb[0].mxu0 %v598
        %v669 = vpop.f32.mrb[0].mxu0
        %v670 = vadd.f32 %v589, %v669
        %v671 = vpop.f32.mrb[0].mxu0
        %672 = vmatprep.mubr.f32.mxu0 0.0
        %673 = vmatmul.mubr.f32.gmra.mrb[0].mxu0 %v601
        %v674 = vpop.f32.mrb[0].mxu0
        %v675 = vadd.f32 %v594, %v674
        %v676 = vpop.f32.mrb[0].mxu0
        %677 = vdwg.mxu0
        %v681 = vrot.slane %v487, 1
        %v682 = vrot.slane %v488, 1
        %v683 = vsel %vm252, %v681, %v682
        %v684 = vrot.slane %v489, 1
        %v685 = vsel %vm252, %v682, %v684
        %686 = vrot.lane.b32.xlu0 %v683, 127
        %v687 = vpop.permute.xlu0 %686
        %688 = vrot.lane.b32.xlu0 %v685, 127
        %v689 = vpop.permute.xlu0 %688
        %v690 = vsel %vm517, %v687, 0
        %v692 = vsel %vm517, %v689, 0
        %694 = vmatprep.subr.mxu0 0.0
        %695 = vmatpush1.msra.mxu0 %v509
        %696 = vmatprep.subr.mxu0 0.0
        %697 = vmatpush1.msra.mxu0 %v510
        %698 = vmatprep.subr.mxu0 0.0
        %699 = vmatpush1.msra.mxu0 0.0
        %700 = vmatprep.subr.mxu0 0.0
        %701 = vmatpush1.msra.mxu0 0.0
        %702 = vmatprep.subr.mxu0 0.0
        %703 = vmatpush1.msra.mxu0 0.0
        %704 = vmatprep.subr.mxu0 0.0
        %705 = vmatpush1.msra.mxu0 0.0
        %706 = vmatprep.subr.mxu0 0.0
        %707 = vmatpush1.msra.mxu0 0.0
        %708 = vmatprep.subr.mxu0 0.0
        %709 = vmatpush1.msra.mxu0 0.0
        %710 = vmatprep.subr.mxu0 0.0
        %711 = vmatpush1.msra.mxu0 0.0
        %712 = vmatprep.subr.mxu0 0.0
        %713 = vmatpush1.msra.mxu0 0.0
        %714 = vmatprep.subr.mxu0 0.0
        %715 = vmatpush1.msra.mxu0 0.0
        %716 = vmatprep.subr.mxu0 0.0
        %717 = vmatpush1.msra.mxu0 0.0
        %718 = vmatprep.subr.mxu0 0.0
        %719 = vmatpush1.msra.mxu0 0.0
        %720 = vmatprep.subr.mxu0 0.0
        %721 = vmatpush1.msra.mxu0 0.0
        %722 = vmatprep.subr.mxu0 0.0
        %723 = vmatpush1.msra.mxu0 0.0
        %724 = vmatprep.subr.mxu0 0.0
        %725 = vmatpush1.msra.mxu0 0.0
        %726 = vmatprep.subr.mxu0 0.0
        %727 = vmatpush1.msra.mxu0 0.0
        %728 = vmatprep.subr.mxu0 0.0
        %729 = vmatpush1.msra.mxu0 0.0
        %730 = vmatprep.subr.mxu0 0.0
        %731 = vmatpush1.msra.mxu0 0.0
        %732 = vmatprep.subr.mxu0 0.0
        %733 = vmatpush1.msra.mxu0 0.0
        %734 = vmatprep.subr.mxu0 0.0
        %735 = vmatpush1.msra.mxu0 0.0
        %736 = vmatprep.subr.mxu0 0.0
        %737 = vmatpush1.msra.mxu0 0.0
        %738 = vmatprep.subr.mxu0 0.0
        %739 = vmatpush1.msra.mxu0 0.0
        %740 = vmatprep.subr.mxu0 0.0
        %741 = vmatpush1.msra.mxu0 0.0
        %742 = vmatprep.subr.mxu0 0.0
        %743 = vmatpush1.msra.mxu0 0.0
        %744 = vmatprep.subr.mxu0 0.0
        %745 = vmatpush1.msra.mxu0 0.0
        %746 = vmatprep.subr.mxu0 0.0
        %747 = vmatpush1.msra.mxu0 0.0
        %748 = vmatprep.subr.mxu0 0.0
        %749 = vmatpush1.msra.mxu0 0.0
        %750 = vmatprep.subr.mxu0 0.0
        %751 = vmatpush1.msra.mxu0 0.0
        %752 = vmatprep.subr.mxu0 0.0
        %753 = vmatpush1.msra.mxu0 0.0
        %754 = vmatprep.subr.mxu0 0.0
        %755 = vmatpush1.msra.mxu0 0.0
        %756 = vmatprep.subr.mxu0 0.0
        %757 = vmatpush1.msra.mxu0 0.0
        %758 = vmatprep.mubr.f32.mxu0 0.0
        %759 = vmatmul.mubr.f32.gmra.mrb[0].mxu0 %v690
        %v760 = vpop.f32.mrb[0].mxu0
        %v761 = vadd.f32 0.0, %v760
        %v762 = vpop.f32.mrb[0].mxu0
        %763 = vmatprep.mubr.f32.mxu0 0.0
        %764 = vmatmul.mubr.f32.gmra.mrb[0].mxu0 %v692
        %v765 = vpop.f32.mrb[0].mxu0
        %v766 = vadd.f32 0.0, %v765
        %v767 = vpop.f32.mrb[0].mxu0
        %768 = vdwg.mxu0
        %v772 = vrot.slane %v414, 1
        %v773 = vrot.slane %v415, 1
        %v774 = vsel %vm252, %v772, %v773
        %v775 = vrot.slane %v416, 1
        %v776 = vsel %vm252, %v773, %v775
        %v777 = vsel %vm517, %v774, 0
        %v779 = vsel %vm517, %v776, 0
        %781 = vmatprep.subr.mxu0 0.0
        %782 = vmatpush1.msra.mxu0 %v501
        %783 = vmatprep.subr.mxu0 0.0
        %784 = vmatpush1.msra.mxu0 %v502
        %785 = vmatprep.subr.mxu0 0.0
        %786 = vmatpush1.msra.mxu0 0.0
        %787 = vmatprep.subr.mxu0 0.0
        %788 = vmatpush1.msra.mxu0 0.0
        %789 = vmatprep.subr.mxu0 0.0
        %790 = vmatpush1.msra.mxu0 0.0
        %791 = vmatprep.subr.mxu0 0.0
        %792 = vmatpush1.msra.mxu0 0.0
        %793 = vmatprep.subr.mxu0 0.0
        %794 = vmatpush1.msra.mxu0 0.0
        %795 = vmatprep.subr.mxu0 0.0
        %796 = vmatpush1.msra.mxu0 0.0
        %797 = vmatprep.subr.mxu0 0.0
        %798 = vmatpush1.msra.mxu0 0.0
        %799 = vmatprep.subr.mxu0 0.0
        %800 = vmatpush1.msra.mxu0 0.0
        %801 = vmatprep.subr.mxu0 0.0
        %802 = vmatpush1.msra.mxu0 0.0
        %803 = vmatprep.subr.mxu0 0.0
        %804 = vmatpush1.msra.mxu0 0.0
        %805 = vmatprep.subr.mxu0 0.0
        %806 = vmatpush1.msra.mxu0 0.0
        %807 = vmatprep.subr.mxu0 0.0
        %808 = vmatpush1.msra.mxu0 0.0
        %809 = vmatprep.subr.mxu0 0.0
        %810 = vmatpush1.msra.mxu0 0.0
        %811 = vmatprep.subr.mxu0 0.0
        %812 = vmatpush1.msra.mxu0 0.0
        %813 = vmatprep.subr.mxu0 0.0
        %814 = vmatpush1.msra.mxu0 0.0
        %815 = vmatprep.subr.mxu0 0.0
        %816 = vmatpush1.msra.mxu0 0.0
        %817 = vmatprep.subr.mxu0 0.0
        %818 = vmatpush1.msra.mxu0 0.0
        %819 = vmatprep.subr.mxu0 0.0
        %820 = vmatpush1.msra.mxu0 0.0
        %821 = vmatprep.subr.mxu0 0.0
        %822 = vmatpush1.msra.mxu0 0.0
        %823 = vmatprep.subr.mxu0 0.0
        %824 = vmatpush1.msra.mxu0 0.0
        %825 = vmatprep.subr.mxu0 0.0
        %826 = vmatpush1.msra.mxu0 0.0
        %827 = vmatprep.subr.mxu0 0.0
        %828 = vmatpush1.msra.mxu0 0.0
        %829 = vmatprep.subr.mxu0 0.0
        %830 = vmatpush1.msra.mxu0 0.0
        %831 = vmatprep.subr.mxu0 0.0
        %832 = vmatpush1.msra.mxu0 0.0
        %833 = vmatprep.subr.mxu0 0.0
        %834 = vmatpush1.msra.mxu0 0.0
        %835 = vmatprep.subr.mxu0 0.0
        %836 = vmatpush1.msra.mxu0 0.0
        %837 = vmatprep.subr.mxu0 0.0
        %838 = vmatpush1.msra.mxu0 0.0
        %839 = vmatprep.subr.mxu0 0.0
        %840 = vmatpush1.msra.mxu0 0.0
        %841 = vmatprep.subr.mxu0 0.0
        %842 = vmatpush1.msra.mxu0 0.0
        %843 = vmatprep.subr.mxu0 0.0
        %844 = vmatpush1.msra.mxu0 0.0
        %845 = vmatprep.mubr.f32.mxu0 0.0
        %846 = vmatmul.mubr.f32.gmra.mrb[0].mxu0 %v777
        %v847 = vpop.f32.mrb[0].mxu0
        %v848 = vadd.f32 %v761, %v847
        %v849 = vpop.f32.mrb[0].mxu0
        %850 = vmatprep.mubr.f32.mxu0 0.0
        %851 = vmatmul.mubr.f32.gmra.mrb[0].mxu0 %v779
        %v852 = vpop.f32.mrb[0].mxu0
        %v853 = vadd.f32 %v766, %v852
        %v854 = vpop.f32.mrb[0].mxu0
        %855 = vdwg.mxu0
        %858 = vrot.lane.b32.xlu0 %v848, 32
        %v859 = vpop.permute.xlu0 %858
        %860 = vrot.lane.b32.xlu0 %v853, 32
        %v861 = vpop.permute.xlu0 %860
        %vm864 = vcmask 261120
        %v865 = vsel %vm864, %v670, %v859
        %v866 = vsel %vm864, %v675, %v861
        %vm867 = vcmask 523264
        %868 = vst.msk [vmem:[%s191] sm:$0xff] %vm867, %v865
        %869 = vst.msk [vmem:[%s191 + $0x8] sm:$0xff] %vm867, %v866
        %s870 = sand.u32 %s91, 1
        %s871 = scalar_lea.sflag [#allocation4], %s870
        %s872 = sand.u32 %s91, 1
        %s873 = smul.addr %s872, 16
        %s874 = scalar_lea.vmem [#allocation7], %s873
        // Predicated region
        $region37: #{tpu_custom_call.1} parent=27 // pred_check
          %p875 = pneg %p101
        $region38: #{tpu_custom_call.1} parent=27 // pred_check_branch
          %877 = sbr.rel (%p875) target = $region40
        $region39: #{tpu_custom_call.1} parent=27 // pred_region
          %s879 = ssub.s32 256, 256
          %880 = vsyncadd %s871, %s879
          %s881 = smul.addr %s25, 2
          %s882 = smul.addr %s24, 8
          %s883 = sadd.s32 %s881, %s882
          %s884 = smul.addr %s883, 128
          %s885 = scalar_lea.hbm %s2, %s884
          %s886 = sshll.u32 %s874, 4
          %s887 = int_to_ptr.vmem [resolvable:$true] %s886
          %892 = dma.vmem_to_hbm [thread:$0]  %s887, 256, %s885, %s871, 128, 128, 8
        $region40: #{tpu_custom_call.1} parent=27 // pred_fallthru
          _
      $region28: #{tpu_custom_call.1} parent=5 // pred_fallthru
        _
      %p893 = scmp.le.s32.totalorder 2, %s15
      // Predicated region
      $region41: #{tpu_custom_call.1} parent=5 // pred_check
        %p894 = pneg %p893
      $region42: #{tpu_custom_call.1} parent=5 // pred_check_branch
        %896 = sbr.rel (%p894) target = $region44
      $region43: #{tpu_custom_call.1} parent=5 // pred_region
        %s897 = ssub.s32 %s15, 2
        // Predicated region
        $region45: #{tpu_custom_call.1} parent=43 // pred_check
          %p898 = pneg %p107
        $region46: #{tpu_custom_call.1} parent=43 // pred_check_branch
          %900 = sbr.rel (%p898) target = $region48
        $region47: #{tpu_custom_call.1} parent=43 // pred_region
          %s901 = sand.u32 %s92, 1
          %s902 = scalar_lea.sflag [#allocation4], %s901
          %s903 = sand.u32 %s92, 1
          %s904 = smul.addr %s903, 16
          %s905 = scalar_lea.vmem [#allocation7], %s904
          %906 = dma.done %s902, 256
        $region48: #{tpu_custom_call.1} parent=43 // pred_fallthru
          _
      $region44: #{tpu_custom_call.1} parent=5 // pred_fallthru
        _
    $region6: #{tpu_custom_call.1} parent=1 // loop_footer
      %s19 = sadd.s32 1, %s15
    $region7: #{tpu_custom_call.1} parent=1 // loop_footer_branch
      %14 = sbr.rel target = $region3
    $region8: #{tpu_custom_call.1} parent=1 // loop_exit
      _
    %907 = vsyncpa [#allocation3], 1
    %s908 = scalar_lea.sflag [#allocation3], 1
    %909 = vsyncpa %s908, 1
    %910 = vsyncpa [#allocation4], 1
    %s911 = scalar_lea.sflag [#allocation4], 1
    %912 = vsyncpa %s911, 1
    %913 = vsyncpa [#allocation5], 1
    %s914 = scalar_lea.sflag [#allocation5], 1
    %915 = vsyncpa %s914, 1

</llo_original>
